<compile_context>
chip_gen: v7x
topology: tpu7x:2x2x1
jax: 0.10.0
libtpu: 0.0.40
codegen_flags: <defaults>
</compile_context>

<pallas_src>
import jax
import jax.numpy as jnp
from jax.experimental import pallas as pl
from jax.experimental.pallas import tpu as pltpu


def _exp_kernel(x_ref, o_ref):
    # Elementwise exp on the whole VMEM tile (EUP transcendental path).
    o_ref[...] = jnp.exp(x_ref[...]).astype(o_ref.dtype)


_SMALL_BYTES = 512 << 10          # single-block fast path threshold
_TARGET_BLOCK_BYTES = 2 << 20     # ~2 MiB blocks for the tiled path


def _choose_cols(n: int) -> int:
    """Pick a lane-dense column width (multiple of 128) that divides n exactly.

    Returns 0 if no such divisor exists (handled by the padded fallback)."""
    for c in (8192, 4096, 2048, 1024, 512, 256, 128):
        if n % c == 0:
            return c
    return 0


def _row_tile(rows: int, cols: int, bytes_per_elem: int, min_rows: int) -> int:
    """Row-tile sized for ~_TARGET_BLOCK_BYTES blocks, respecting dtype sublane
    minimums (8 / 16 / 32 rows for 4 / 2 / 1-byte elements)."""
    bytes_per_row = cols * bytes_per_elem
    tr = max(_TARGET_BLOCK_BYTES // bytes_per_row, 1)
    if tr >= rows:
        return rows  # full-extent block along rows -> always legal
    tr = max((tr // min_rows) * min_rows, min_rows)
    return min(tr, rows)


def _tiled_exp_2d(x2: jax.Array, out_dtype, elem_bytes: int, min_rows: int) -> jax.Array:
    rows, cols = x2.shape
    tr = _row_tile(rows, cols, elem_bytes, min_rows)
    grid = (pl.cdiv(rows, tr),)  # ragged last block handled by Pallas masking
    return pl.pallas_call(
        _exp_kernel,
        out_shape=jax.ShapeDtypeStruct((rows, cols), out_dtype),
        grid=grid,
        in_specs=[pl.BlockSpec((tr, cols), lambda i: (i, 0))],
        out_specs=pl.BlockSpec((tr, cols), lambda i: (i, 0)),
        compiler_params=pltpu.CompilerParams(
            dimension_semantics=("arbitrary",),
        ),
    )(x2)


def exp_activation(x: jax.Array) -> jax.Array:
    """y = exp(x), elementwise, via a Pallas TPU kernel."""
    orig_shape = x.shape
    n = 1
    for s in orig_shape:
        n *= s

    # jnp.exp promotes integer inputs to float (matches torch.exp behavior).
    out_dtype = jax.eval_shape(jnp.exp, jax.ShapeDtypeStruct((), x.dtype)).dtype

    if n == 0:
        return jnp.exp(x)  # degenerate empty tensor; nothing for a kernel to do

    in_bytes = jnp.dtype(x.dtype).itemsize
    out_bytes = jnp.dtype(out_dtype).itemsize
    elem_bytes = max(in_bytes, out_bytes)
    min_rows = {4: 8, 2: 16, 1: 32}.get(in_bytes, 8)

    xf = x.reshape(1, n)  # flat, lane-dense view (reshape of contiguous data)

    # ---- small-input fast path: one un-gridded call, whole array as a block ----
    if n * elem_bytes <= _SMALL_BYTES:
        out = pl.pallas_call(
            _exp_kernel,
            out_shape=jax.ShapeDtypeStruct((1, n), out_dtype),
        )(xf)
        return out.reshape(orig_shape)

    # ---- large-input tiled path ----
    cols = _choose_cols(n)
    if cols != 0:
        rows = n // cols
        out = _tiled_exp_2d(xf.reshape(rows, cols), out_dtype, elem_bytes, min_rows)
        return out.reshape(orig_shape)

    # ---- rare fallback: no lane-dense divisor -> pad flat vector, slice back ----
    cols = 1024
    rows = pl.cdiv(n, cols)
    pad = rows * cols - n
    xp = jnp.pad(xf, ((0, 0), (0, pad))).reshape(rows, cols)
    out = _tiled_exp_2d(xp, out_dtype, elem_bytes, min_rows)
    return out.reshape(rows * cols)[:n].reshape(orig_shape)


if __name__ == "__main__":
    key = jax.random.PRNGKey(0)

    # Shape consistent with how ExpActivation is used in mrvi (hidden activation).
    x_small = jax.random.normal(key, (2, 4, 16, 16), dtype=jnp.float32)
    y_small = jax.block_until_ready(exp_activation(x_small))
    assert y_small.shape == x_small.shape and y_small.dtype == x_small.dtype
    assert jnp.allclose(y_small, jnp.exp(x_small), rtol=1e-6, atol=1e-6)

    # A larger input to exercise the tiled path (cdiv grid + ragged last block).
    k1, k2 = jax.random.split(key)
    x_big = jax.random.normal(k1, (1024, 1032), dtype=jnp.float32)
    y_big = jax.block_until_ready(exp_activation(x_big))
    assert y_big.shape == x_big.shape and y_big.dtype == x_big.dtype
    assert jnp.allclose(y_big, jnp.exp(x_big), rtol=1e-6, atol=1e-6)

    # bf16 input to exercise the dtype-aware row-tile minimum.
    x_bf16 = jax.random.normal(k2, (256, 2048), dtype=jnp.bfloat16)
    y_bf16 = jax.block_until_ready(exp_activation(x_bf16))
    assert y_bf16.shape == x_bf16.shape and y_bf16.dtype == x_bf16.dtype
    assert jnp.allclose(
        y_bf16.astype(jnp.float32),
        jnp.exp(x_bf16.astype(jnp.float32)),
        rtol=2e-2, atol=2e-2,
    )

    print("KERNEL_OK")
</pallas_src>

<mosaic_0001>
module attributes {stable_mosaic.version = 11 : i64} {
  func.func @_exp_kernel(%arg0: memref<1x2048xf32, #tpu.memory_space<vmem>>, %arg1: memref<1x2048xf32, #tpu.memory_space<vmem>>) attributes {dimension_semantics = [], scalar_prefetch = 0 : i64, scratch_operands = 0 : i64, tpu.core_type = #tpu.core_type<tc>} {
    %c0 = arith.constant 0 : index
    %c0_0 = arith.constant 0 : index
    %0 = vector.load %arg0[%c0, %c0_0] : memref<1x2048xf32, #tpu.memory_space<vmem>>, vector<1x2048xf32>
    %1 = math.exp %0 : vector<1x2048xf32>
    %c0_1 = arith.constant 0 : index
    %c0_2 = arith.constant 0 : index
    %2 = vector.load %arg1[%c0_1, %c0_2] : memref<1x2048xf32, #tpu.memory_space<vmem>>, vector<1x2048xf32>
    tpu.vector_store %arg1[%c0_1, %c0_2], %1 {strides = array<i32>} : memref<1x2048xf32, #tpu.memory_space<vmem>>, vector<1x2048xf32>,
    return
  }
}

</mosaic_0001>

<llo_original>
// kernel: tpu_custom_call.1
$region0: #{tpu_custom_call.1}
  #allocation0 [shape = 'u32[]', space=smem, size = 0x4, offset = 0x4, fixed_abs, tag = 'smem constant byte address 0x4 - core index']
  #allocation1 [shape = 'u32[144,128]{1,0:T(1,128)}', space=vmem, size = 0x12000, scoped, tag = 'internal scratch']
  %s0 = inlined_call_operand.hbm [shape: f32[1,2048], index: 0, kind: input, shape index: {}]
  %s1 = inlined_call_operand.hbm [shape: f32[1,2048], index: 1, kind: output, shape index: {}]
  %s2 = sld [smem:[#allocation0]]
  $region18: #{tpu_custom_call.1} parent=0
    _
  %s4 = ssub.s32 1, %s2
  %s5 = scalar_select 0, %s4, %s2
  $region1: #{tpu_custom_call.1} parent=0
    #allocation2 [shape = 'u8[8192]{0}', space=vmem, size = 0x2000, scoped, tag = 'input window, operand 0, single buffered']
    #allocation3 [shape = 's32[1]{0}', space=sflag, size = 0x4, scoped, tag = 'scoped memory for tpu_custom_call.1']
    #allocation4 [shape = 's32[1]{0}', space=sflag, size = 0x4, scoped, tag = 'scoped memory for tpu_custom_call.1']
    #allocation5 [shape = 'u8[8192]{0}', space=vmem, size = 0x2000, scoped, tag = 'output window, operand 0, single buffered']
    %6 = vsyncpa [#allocation3], 0
    %7 = vsyncpa [#allocation4], 0
    // Predicated region
    $region2: #{tpu_custom_call.1} parent=1 // pred_check
      _
    $region3: #{tpu_custom_call.1} parent=1 // pred_check_branch
      %9 = sbr.rel (0) target = $region5
    $region4: #{tpu_custom_call.1} parent=1 // pred_region
      %s11 = ssub.s32 256, 256
      %12 = vsyncadd [#allocation3], %s11
      %s14 = sshll.u32 [#allocation2], 4
      %s15 = int_to_ptr.vmem [resolvable:$true] %s14
      %17 = dma.hbm_to_vmem [thread:$0]  %s0, 256, %s15, [#allocation3]
    $region5: #{tpu_custom_call.1} parent=1 // pred_fallthru
      _
    // Predicated region
    $region6: #{tpu_custom_call.1} parent=1 // pred_check
      _
    $region7: #{tpu_custom_call.1} parent=1 // pred_check_branch
      %19 = sbr.rel (0) target = $region9
    $region8: #{tpu_custom_call.1} parent=1 // pred_region
      %20 = dma.done [#allocation3], 256
    $region9: #{tpu_custom_call.1} parent=1 // pred_fallthru
      _
    %v21 = vld [vmem:[#allocation2] sm:$0xff]
    %v22 = vld [vmem:[#allocation2 + $0x8] sm:$0xff]
    %v23 = vmul.f32 %v21, 1.442695
    %v24 = vpow.pop %v23
    %v25 = vmul.f32 %v22, 1.442695
    %v26 = vpow.pop %v25
    %27 = vst [vmem:[#allocation5] sm:$0xff] %v24
    %28 = vst [vmem:[#allocation5 + $0x8] sm:$0xff] %v26
    // Predicated region
    $region10: #{tpu_custom_call.1} parent=1 // pred_check
      _
    $region11: #{tpu_custom_call.1} parent=1 // pred_check_branch
      %30 = sbr.rel (0) target = $region13
    $region12: #{tpu_custom_call.1} parent=1 // pred_region
      %s32 = ssub.s32 256, 256
      %33 = vsyncadd [#allocation4], %s32
      %s35 = sshll.u32 [#allocation5], 4
      %s36 = int_to_ptr.vmem [resolvable:$true] %s35
      %38 = dma.vmem_to_hbm [thread:$0]  %s36, 256, %s1, [#allocation4]
    $region13: #{tpu_custom_call.1} parent=1 // pred_fallthru
      _
    // Predicated region
    $region14: #{tpu_custom_call.1} parent=1 // pred_check
      _
    $region15: #{tpu_custom_call.1} parent=1 // pred_check_branch
      %40 = sbr.rel (0) target = $region17
    $region16: #{tpu_custom_call.1} parent=1 // pred_region
      %41 = dma.done [#allocation4], 256
    $region17: #{tpu_custom_call.1} parent=1 // pred_fallthru
      _
    %42 = vsyncpa [#allocation3], 1
    %43 = vsyncpa [#allocation4], 1

</llo_original>
